<compile_context>
chip_gen: v7x
topology: tpu7x:2x2x1
jax: 0.10.0
libtpu: 0.0.40
codegen_flags: <defaults>
</compile_context>

<pallas_src>
import functools
import math

import jax
import jax.numpy as jnp
import numpy as np
from jax.experimental import pallas as pl
from jax.experimental.pallas import tpu as pltpu

LOG_STD_MIN = -20.0
LOG_STD_MAX = 2.0
_HALF_LOG_2PI = 0.5 * math.log(2.0 * math.pi)
_LOG2 = math.log(2.0)


def _softplus(x):
    # numerically stable softplus, matches F.softplus semantics
    return jnp.maximum(x, 0.0) + jnp.log1p(jnp.exp(-jnp.abs(x)))


def _round_up(x, m):
    return ((x + m - 1) // m) * m


def _cdiv(a, b):
    return -(-a // b)


# --------------------------------------------------------------------------
# Kernel
# --------------------------------------------------------------------------
def actor_kernel(obs_ref, w1_ref, b1_ref, w2_ref, b2_ref,
                 wh_ref, bh_ref, eps_ref, amean_ref, astd_ref,
                 out_ref, *, act_dim, compute_dtype):
    cd = compute_dtype
    x = obs_ref[...].astype(cd)

    # --- MLP backbone: Linear + ReLU, Linear + ReLU (output_activation=ReLU)
    h = jnp.dot(x, w1_ref[...], preferred_element_type=jnp.float32) + b1_ref[...]
    h = jnp.maximum(h, 0.0)
    h = jnp.dot(h.astype(cd), w2_ref[...],
                preferred_element_type=jnp.float32) + b2_ref[...]
    h = jnp.maximum(h, 0.0)

    # --- fused heads: one matmul producing [mu | log_std] ---
    heads = jnp.dot(h.astype(cd), wh_ref[...],
                    preferred_element_type=jnp.float32) + bh_ref[...]
    mu = heads[:, :act_dim]
    log_std = jnp.clip(heads[:, act_dim:], LOG_STD_MIN, LOG_STD_MAX)
    std = jnp.exp(log_std)

    # --- rsample: pi = mu + std * eps ---
    eps = eps_ref[...]
    pi = mu + std * eps

    # --- logp: Normal log-prob (z == eps analytically) fused with the
    #     tanh-squash correction; single cross-lane reduction ---
    corr = 2.0 * (_LOG2 - pi - _softplus(-2.0 * pi))
    per_lane = -0.5 * (eps * eps) - log_std - _HALF_LOG_2PI - corr
    logp = jnp.sum(per_lane, axis=-1, keepdims=True)

    action = astd_ref[...] * jnp.tanh(pi) + amean_ref[...]

    # --- narrow, fully-written output slab: [action | mu | std | logp] ---
    # direct slice stores (no concatenate, no zero pad, no logp broadcast)
    out_ref[:, 0:act_dim] = action
    out_ref[:, act_dim:2 * act_dim] = mu
    out_ref[:, 2 * act_dim:3 * act_dim] = std
    out_ref[:, 3 * act_dim:3 * act_dim + 1] = logp


# --------------------------------------------------------------------------
# One-time parameter prep (hoisted out of the hot path)
# --------------------------------------------------------------------------
def prepare_actor_params(params, act_mean, act_std, compute_dtype=jnp.float32):
    """Fuse the mu/log_std heads and cast once.  compute_dtype=jnp.bfloat16
    is recommended on v6e/v7x; keep jnp.float32 on v5e / for exact parity."""
    act_dim = params["w_mu"].shape[1]
    return {
        "w1": params["w1"].astype(compute_dtype),
        "b1": params["b1"].reshape(1, -1).astype(jnp.float32),
        "w2": params["w2"].astype(compute_dtype),
        "b2": params["b2"].reshape(1, -1).astype(jnp.float32),
        "w_head": jnp.concatenate(
            [params["w_mu"], params["w_ls"]], axis=1).astype(compute_dtype),
        "b_head": jnp.concatenate(
            [params["b_mu"].reshape(1, -1), params["b_ls"].reshape(1, -1)],
            axis=1).astype(jnp.float32),
        "act_mean": act_mean.reshape(1, act_dim).astype(jnp.float32),
        "act_std": act_std.reshape(1, act_dim).astype(jnp.float32),
    }


# --------------------------------------------------------------------------
# Hot-path wrapper
# --------------------------------------------------------------------------
@functools.partial(jax.jit, static_argnames=("block_b",))
def squashed_gaussian_actor(obs, eps, prep, *, block_b=1024):
    obs = obs.astype(jnp.float32)
    eps = eps.astype(jnp.float32)
    B, obs_dim = obs.shape
    act_dim = prep["act_mean"].shape[1]
    compute_dtype = prep["w1"].dtype
    slab_w = 3 * act_dim + 1          # [action | mu | std | logp], no padding

    # Batch tiling: sublane-aligned tiles; pad only to the next multiple of 8
    # rows (<= 7 rows).  Ragged last tiles are handled by Pallas partial-block
    # DMA (only valid rows are copied / written back).
    b8 = _round_up(B, 8)
    blk = min(_round_up(block_b, 8), b8)
    if b8 > 8:
        # guarantee >= 2 grid steps so v7x's second TensorCore gets work
        blk = min(blk, _round_up(_cdiv(b8, 2), 8))
    grid_n = _cdiv(b8, blk)

    if b8 != B:
        obs = jnp.pad(obs, ((0, b8 - B), (0, 0)))
        eps = jnp.pad(eps, ((0, b8 - B), (0, 0)))

    def batch_spec(shape):
        nd = len(shape)
        return pl.BlockSpec((blk,) + tuple(shape[1:]),
                            lambda i, _nd=nd: (i,) + (0,) * (_nd - 1))

    def resident_spec(shape):
        # Same block index every grid step -> one DMA, stays VMEM-resident.
        nd = len(shape)
        return pl.BlockSpec(tuple(shape), lambda i, _nd=nd: (0,) * _nd)

    kernel = functools.partial(actor_kernel,
                               act_dim=act_dim, compute_dtype=compute_dtype)

    slab = pl.pallas_call(
        kernel,
        grid=(grid_n,),
        in_specs=[
            batch_spec(obs.shape),
            resident_spec(prep["w1"].shape), resident_spec(prep["b1"].shape),
            resident_spec(prep["w2"].shape), resident_spec(prep["b2"].shape),
            resident_spec(prep["w_head"].shape), resident_spec(prep["b_head"].shape),
            batch_spec(eps.shape),
            resident_spec(prep["act_mean"].shape), resident_spec(prep["act_std"].shape),
        ],
        out_specs=pl.BlockSpec((blk, slab_w), lambda i: (i, 0)),
        out_shape=jax.ShapeDtypeStruct((b8, slab_w), jnp.float32),
        compiler_params=pltpu.CompilerParams(
            dimension_semantics=("parallel",)),   # batch axis megacore-shardable
    )(obs, prep["w1"], prep["b1"], prep["w2"], prep["b2"],
      prep["w_head"], prep["b_head"], eps, prep["act_mean"], prep["act_std"])

    action = slab[:B, 0:act_dim]
    mu = slab[:B, act_dim:2 * act_dim]
    std = slab[:B, 2 * act_dim:3 * act_dim]
    logp_pi = slab[:B, 3 * act_dim]
    return action, logp_pi, mu, std


# --------------------------------------------------------------------------
# Plain-JAX reference (original, unfused formulas) + init
# --------------------------------------------------------------------------
def reference_forward(obs, params, eps, act_mean, act_std):
    h = jnp.maximum(obs @ params["w1"] + params["b1"], 0.0)
    h = jnp.maximum(h @ params["w2"] + params["b2"], 0.0)
    mu = h @ params["w_mu"] + params["b_mu"]
    log_std = jnp.clip(h @ params["w_ls"] + params["b_ls"], LOG_STD_MIN, LOG_STD_MAX)
    std = jnp.exp(log_std)
    pi = mu + std * eps
    z = (pi - mu) / std
    logp = jnp.sum(-0.5 * z * z - log_std - _HALF_LOG_2PI, axis=-1)
    logp = logp - jnp.sum(2.0 * (_LOG2 - pi - _softplus(-2.0 * pi)), axis=-1)
    act = act_std.reshape(1, -1) * jnp.tanh(pi) + act_mean.reshape(1, -1)
    return act, logp, mu, std


def init_params(key, obs_dim, hidden_sizes, act_dim):
    """Deterministic PyTorch-Linear-style init; weights stored [in, out]."""
    sizes = [obs_dim] + hidden_sizes
    params = {}
    keys = jax.random.split(key, 8)

    def linear(kw, kb, fan_in, fan_out):
        bound = 1.0 / math.sqrt(fan_in)
        w = jax.random.uniform(kw, (fan_in, fan_out), jnp.float32, -bound, bound)
        b = jax.random.uniform(kb, (1, fan_out), jnp.float32, -bound, bound)
        return w, b

    params["w1"], params["b1"] = linear(keys[0], keys[1], sizes[0], sizes[1])
    params["w2"], params["b2"] = linear(keys[2], keys[3], sizes[1], sizes[2])
    params["w_mu"], params["b_mu"] = linear(keys[4], keys[5], sizes[2], act_dim)
    params["w_ls"], params["b_ls"] = linear(keys[6], keys[7], sizes[2], act_dim)
    return params


if __name__ == "__main__":
    B, OBS_DIM, ACT_DIM = 8, 16, 8
    HIDDEN = [32, 32]

    key = jax.random.PRNGKey(0)
    k_param, k_obs, k_eps, k_obs2, k_eps2 = jax.random.split(key, 5)

    params = init_params(k_param, OBS_DIM, HIDDEN, ACT_DIM)
    obs = jax.random.normal(k_obs, (B, OBS_DIM), jnp.float32)
    eps = jax.random.normal(k_eps, (B, ACT_DIM), jnp.float32)  # rsample noise
    act_mean = jnp.linspace(-0.5, 0.5, ACT_DIM, dtype=jnp.float32)
    act_std = jnp.linspace(0.5, 1.5, ACT_DIM, dtype=jnp.float32)

    # ---- f32 compute: exact parity with the PyTorch module ----
    prep_f32 = prepare_actor_params(params, act_mean, act_std, jnp.float32)
    action, logp_pi, mu, std = squashed_gaussian_actor(obs, eps, prep_f32)
    jax.block_until_ready((action, logp_pi, mu, std))

    ref_act, ref_logp, ref_mu, ref_std = reference_forward(
        obs, params, eps, act_mean, act_std)
    np.testing.assert_allclose(np.asarray(action), np.asarray(ref_act), rtol=1e-4, atol=1e-5)
    np.testing.assert_allclose(np.asarray(logp_pi), np.asarray(ref_logp), rtol=1e-4, atol=1e-4)
    np.testing.assert_allclose(np.asarray(mu), np.asarray(ref_mu), rtol=1e-4, atol=1e-5)
    np.testing.assert_allclose(np.asarray(std), np.asarray(ref_std), rtol=1e-4, atol=1e-5)
    assert action.shape == (B, ACT_DIM) and logp_pi.shape == (B,)
    assert mu.shape == (B, ACT_DIM) and std.shape == (B, ACT_DIM)
    assert bool(jnp.all(jnp.isfinite(action))) and bool(jnp.all(jnp.isfinite(logp_pi)))

    # ---- ragged batch (B not a multiple of the tile) exercises the
    #      minimal-padding / partial-tile path and the 2-tile grid ----
    B2 = 20
    obs2 = jax.random.normal(k_obs2, (B2, OBS_DIM), jnp.float32)
    eps2 = jax.random.normal(k_eps2, (B2, ACT_DIM), jnp.float32)
    a2, lp2, mu2, std2 = squashed_gaussian_actor(obs2, eps2, prep_f32)
    jax.block_until_ready((a2, lp2))
    r_a2, r_lp2, r_mu2, r_std2 = reference_forward(obs2, params, eps2, act_mean, act_std)
    np.testing.assert_allclose(np.asarray(a2), np.asarray(r_a2), rtol=1e-4, atol=1e-5)
    np.testing.assert_allclose(np.asarray(lp2), np.asarray(r_lp2), rtol=1e-4, atol=1e-4)
    np.testing.assert_allclose(np.asarray(mu2), np.asarray(r_mu2), rtol=1e-4, atol=1e-5)
    np.testing.assert_allclose(np.asarray(std2), np.asarray(r_std2), rtol=1e-4, atol=1e-5)

    # ---- bf16 matmul path (recommended on v6e/v7x); loose tolerances ----
    prep_bf16 = prepare_actor_params(params, act_mean, act_std, jnp.bfloat16)
    a3, lp3, mu3, std3 = squashed_gaussian_actor(obs, eps, prep_bf16)
    jax.block_until_ready((a3, lp3))
    np.testing.assert_allclose(np.asarray(a3), np.asarray(ref_act), rtol=5e-2, atol=5e-2)
    assert bool(jnp.all(jnp.isfinite(lp3))) and bool(jnp.all(jnp.isfinite(std3)))

    print("KERNEL_OK")
</pallas_src>

<mosaic_0001>
module attributes {stable_mosaic.version = 11 : i64} {
  func.func @actor_kernel(%arg0: i32, %arg1: memref<8x16xf32, #tpu.memory_space<vmem>>, %arg2: memref<16x32xf32, #tpu.memory_space<vmem>>, %arg3: memref<1x32xf32, #tpu.memory_space<vmem>>, %arg4: memref<32x32xf32, #tpu.memory_space<vmem>>, %arg5: memref<1x32xf32, #tpu.memory_space<vmem>>, %arg6: memref<32x16xf32, #tpu.memory_space<vmem>>, %arg7: memref<1x16xf32, #tpu.memory_space<vmem>>, %arg8: memref<8x8xf32, #tpu.memory_space<vmem>>, %arg9: memref<1x8xf32, #tpu.memory_space<vmem>>, %arg10: memref<1x8xf32, #tpu.memory_space<vmem>>, %arg11: memref<8x25xf32, #tpu.memory_space<vmem>>) attributes {dimension_semantics = [#tpu.dimension_semantics<parallel>], iteration_bounds = array<i64: 1>, scalar_prefetch = 0 : i64, scratch_operands = 0 : i64, tpu.core_type = #tpu.core_type<tc>, window_params = [{transform_indices = @transform_0, window_bounds = array<i64: 8, 16>}, {pipeline_mode = #tpu.pipeline_mode<synchronous>, transform_indices = @transform_1, window_bounds = array<i64: 16, 32>}, {pipeline_mode = #tpu.pipeline_mode<synchronous>, transform_indices = @transform_2, window_bounds = array<i64: 1, 32>}, {pipeline_mode = #tpu.pipeline_mode<synchronous>, transform_indices = @transform_3, window_bounds = array<i64: 32, 32>}, {pipeline_mode = #tpu.pipeline_mode<synchronous>, transform_indices = @transform_4, window_bounds = array<i64: 1, 32>}, {pipeline_mode = #tpu.pipeline_mode<synchronous>, transform_indices = @transform_5, window_bounds = array<i64: 32, 16>}, {pipeline_mode = #tpu.pipeline_mode<synchronous>, transform_indices = @transform_6, window_bounds = array<i64: 1, 16>}, {transform_indices = @transform_7, window_bounds = array<i64: 8, 8>}, {pipeline_mode = #tpu.pipeline_mode<synchronous>, transform_indices = @transform_8, window_bounds = array<i64: 1, 8>}, {pipeline_mode = #tpu.pipeline_mode<synchronous>, transform_indices = @transform_9, window_bounds = array<i64: 1, 8>}, {transform_indices = @transform_10, window_bounds = array<i64: 8, 25>}]} {
    %c0 = arith.constant 0 : index
    %c0_0 = arith.constant 0 : index
    %0 = vector.load %arg1[%c0, %c0_0] : memref<8x16xf32, #tpu.memory_space<vmem>>, vector<8x16xf32>
    %c0_1 = arith.constant 0 : index
    %c0_2 = arith.constant 0 : index
    %1 = vector.load %arg2[%c0_1, %c0_2] : memref<16x32xf32, #tpu.memory_space<vmem>>, vector<16x32xf32>
    %cst = arith.constant dense<0.000000e+00> : vector<8x32xf32>
    %2 = tpu.matmul %0, %1, %cst {dimension_numbers = #tpu.dot_dimension_numbers<[1], [0], [0], [1], [0, 0, 1, 1], [], []>} : vector<8x16xf32>, vector<16x32xf32>, vector<8x32xf32> -> vector<8x32xf32>
    %c0_3 = arith.constant 0 : index
    %c0_4 = arith.constant 0 : index
    %3 = vector.load %arg3[%c0_3, %c0_4] : memref<1x32xf32, #tpu.memory_space<vmem>>, vector<1x32xf32>
    %4 = vector.broadcast %3 : vector<1x32xf32> to vector<8x32xf32>
    %5 = arith.addf %2, %4 : vector<8x32xf32>
    %cst_5 = arith.constant 0.000000e+00 : f32
    %6 = vector.broadcast %cst_5 : f32 to vector<8x32xf32>
    %7 = arith.maximumf %5, %6 : vector<8x32xf32>
    %c0_6 = arith.constant 0 : index
    %c0_7 = arith.constant 0 : index
    %8 = vector.load %arg4[%c0_6, %c0_7] : memref<32x32xf32, #tpu.memory_space<vmem>>, vector<32x32xf32>
    %cst_8 = arith.constant dense<0.000000e+00> : vector<8x32xf32>
    %9 = tpu.matmul %7, %8, %cst_8 {dimension_numbers = #tpu.dot_dimension_numbers<[1], [0], [0], [1], [0, 0, 1, 1], [], []>} : vector<8x32xf32>, vector<32x32xf32>, vector<8x32xf32> -> vector<8x32xf32>
    %c0_9 = arith.constant 0 : index
    %c0_10 = arith.constant 0 : index
    %10 = vector.load %arg5[%c0_9, %c0_10] : memref<1x32xf32, #tpu.memory_space<vmem>>, vector<1x32xf32>
    %11 = vector.broadcast %10 : vector<1x32xf32> to vector<8x32xf32>
    %12 = arith.addf %9, %11 : vector<8x32xf32>
    %cst_11 = arith.constant 0.000000e+00 : f32
    %13 = vector.broadcast %cst_11 : f32 to vector<8x32xf32>
    %14 = arith.maximumf %12, %13 : vector<8x32xf32>
    %c0_12 = arith.constant 0 : index
    %c0_13 = arith.constant 0 : index
    %15 = vector.load %arg6[%c0_12, %c0_13] : memref<32x16xf32, #tpu.memory_space<vmem>>, vector<32x16xf32>
    %cst_14 = arith.constant dense<0.000000e+00> : vector<8x16xf32>
    %16 = tpu.matmul %14, %15, %cst_14 {dimension_numbers = #tpu.dot_dimension_numbers<[1], [0], [0], [1], [0, 0, 1, 1], [], []>} : vector<8x32xf32>, vector<32x16xf32>, vector<8x16xf32> -> vector<8x16xf32>
    %c0_15 = arith.constant 0 : index
    %c0_16 = arith.constant 0 : index
    %17 = vector.load %arg7[%c0_15, %c0_16] : memref<1x16xf32, #tpu.memory_space<vmem>>, vector<1x16xf32>
    %18 = vector.broadcast %17 : vector<1x16xf32> to vector<8x16xf32>
    %19 = arith.addf %16, %18 : vector<8x16xf32>
    %20 = vector.extract_strided_slice %19 {offsets = [0, 0], sizes = [8, 8], strides = [1, 1]} : vector<8x16xf32> to vector<8x8xf32>
    %21 = vector.extract_strided_slice %19 {offsets = [0, 8], sizes = [8, 8], strides = [1, 1]} : vector<8x16xf32> to vector<8x8xf32>
    %cst_17 = arith.constant -2.000000e+01 : f32
    %cst_18 = arith.constant 2.000000e+00 : f32
    %22 = vector.broadcast %cst_17 : f32 to vector<8x8xf32>
    %23 = arith.maximumf %22, %21 : vector<8x8xf32>
    %24 = vector.broadcast %cst_18 : f32 to vector<8x8xf32>
    %25 = arith.minimumf %24, %23 : vector<8x8xf32>
    %26 = math.exp %25 : vector<8x8xf32>
    %c0_19 = arith.constant 0 : index
    %c0_20 = arith.constant 0 : index
    %27 = vector.load %arg8[%c0_19, %c0_20] : memref<8x8xf32, #tpu.memory_space<vmem>>, vector<8x8xf32>
    %28 = arith.mulf %26, %27 : vector<8x8xf32>
    %29 = arith.addf %20, %28 : vector<8x8xf32>
    %cst_21 = arith.constant 0.693147182 : f32
    %30 = vector.broadcast %cst_21 : f32 to vector<8x8xf32>
    %31 = arith.subf %30, %29 : vector<8x8xf32>
    %cst_22 = arith.constant -2.000000e+00 : f32
    %32 = vector.broadcast %cst_22 : f32 to vector<8x8xf32>
    %33 = arith.mulf %32, %29 : vector<8x8xf32>
    %cst_23 = arith.constant 0.000000e+00 : f32
    %34 = vector.broadcast %cst_23 : f32 to vector<8x8xf32>
    %35 = arith.maximumf %33, %34 : vector<8x8xf32>
    %36 = math.absf %33 : vector<8x8xf32>
    %cst_24 = arith.constant 0.000000e+00 : f32
    %37 = vector.broadcast %cst_24 : f32 to vector<8x8xf32>
    %38 = arith.subf %37, %36 : vector<8x8xf32>
    %39 = math.exp %38 : vector<8x8xf32>
    %40 = math.log1p %39 : vector<8x8xf32>
    %41 = arith.addf %35, %40 : vector<8x8xf32>
    %42 = arith.subf %31, %41 : vector<8x8xf32>
    %cst_25 = arith.constant 2.000000e+00 : f32
    %43 = vector.broadcast %cst_25 : f32 to vector<8x8xf32>
    %44 = arith.mulf %43, %42 : vector<8x8xf32>
    %45 = arith.mulf %27, %27 : vector<8x8xf32>
    %cst_26 = arith.constant -5.000000e-01 : f32
    %46 = vector.broadcast %cst_26 : f32 to vector<8x8xf32>
    %47 = arith.mulf %46, %45 : vector<8x8xf32>
    %48 = arith.subf %47, %25 : vector<8x8xf32>
    %cst_27 = arith.constant 0.918938517 : f32
    %49 = vector.broadcast %cst_27 : f32 to vector<8x8xf32>
    %50 = arith.subf %48, %49 : vector<8x8xf32>
    %51 = arith.subf %50, %44 : vector<8x8xf32>
    %cst_28 = arith.constant dense<0.000000e+00> : vector<8xf32>
    %52 = vector.multi_reduction <add>, %51, %cst_28 [1] : vector<8x8xf32> to vector<8xf32>
    %53 = vector.shape_cast %52 : vector<8xf32> to vector<8x1xf32>
    %c0_29 = arith.constant 0 : index
    %c0_30 = arith.constant 0 : index
    %54 = vector.load %arg10[%c0_29, %c0_30] : memref<1x8xf32, #tpu.memory_space<vmem>>, vector<1x8xf32>
    %55 = math.tanh %29 : vector<8x8xf32>
    %56 = vector.broadcast %54 : vector<1x8xf32> to vector<8x8xf32>
    %57 = arith.mulf %56, %55 : vector<8x8xf32>
    %c0_31 = arith.constant 0 : index
    %c0_32 = arith.constant 0 : index
    %58 = vector.load %arg9[%c0_31, %c0_32] : memref<1x8xf32, #tpu.memory_space<vmem>>, vector<1x8xf32>
    %59 = vector.broadcast %58 : vector<1x8xf32> to vector<8x8xf32>
    %60 = arith.addf %57, %59 : vector<8x8xf32>
    %c0_33 = arith.constant 0 : index
    %c0_34 = arith.constant 0 : index
    %61 = vector.load %arg11[%c0_33, %c0_34] : memref<8x25xf32, #tpu.memory_space<vmem>>, vector<8x8xf32>
    tpu.vector_store %arg11[%c0_33, %c0_34], %60 {strides = array<i32>} : memref<8x25xf32, #tpu.memory_space<vmem>>, vector<8x8xf32>,
    %c0_35 = arith.constant 0 : index
    %c8 = arith.constant 8 : index
    %62 = vector.load %arg11[%c0_35, %c8] : memref<8x25xf32, #tpu.memory_space<vmem>>, vector<8x8xf32>
    tpu.vector_store %arg11[%c0_35, %c8], %20 {strides = array<i32>} : memref<8x25xf32, #tpu.memory_space<vmem>>, vector<8x8xf32>,
    %c0_36 = arith.constant 0 : index
    %c16 = arith.constant 16 : index
    %63 = vector.load %arg11[%c0_36, %c16] : memref<8x25xf32, #tpu.memory_space<vmem>>, vector<8x8xf32>
    tpu.vector_store %arg11[%c0_36, %c16], %26 {strides = array<i32>} : memref<8x25xf32, #tpu.memory_space<vmem>>, vector<8x8xf32>,
    %c0_37 = arith.constant 0 : index
    %c24 = arith.constant 24 : index
    %64 = vector.load %arg11[%c0_37, %c24] : memref<8x25xf32, #tpu.memory_space<vmem>>, vector<8x1xf32>
    tpu.vector_store %arg11[%c0_37, %c24], %53 {strides = array<i32>} : memref<8x25xf32, #tpu.memory_space<vmem>>, vector<8x1xf32>,
    return
  }
  func.func @transform_0(%arg0: i32) -> (i32, i32) {
    %c0_i32 = arith.constant 0 : i32
    %c0_i32_0 = arith.constant 0 : i32
    return %arg0, %c0_i32 : i32, i32
  }
  func.func @transform_1(%arg0: i32) -> (i32, i32) {
    %c0_i32 = arith.constant 0 : i32
    %c0_i32_0 = arith.constant 0 : i32
    %c0_i32_1 = arith.constant 0 : i32
    return %c0_i32, %c0_i32_0 : i32, i32
  }
  func.func @transform_2(%arg0: i32) -> (i32, i32) {
    %c0_i32 = arith.constant 0 : i32
    %c0_i32_0 = arith.constant 0 : i32
    %c0_i32_1 = arith.constant 0 : i32
    return %c0_i32, %c0_i32_0 : i32, i32
  }
  func.func @transform_3(%arg0: i32) -> (i32, i32) {
    %c0_i32 = arith.constant 0 : i32
    %c0_i32_0 = arith.constant 0 : i32
    %c0_i32_1 = arith.constant 0 : i32
    return %c0_i32, %c0_i32_0 : i32, i32
  }
  func.func @transform_4(%arg0: i32) -> (i32, i32) {
    %c0_i32 = arith.constant 0 : i32
    %c0_i32_0 = arith.constant 0 : i32
    %c0_i32_1 = arith.constant 0 : i32
    return %c0_i32, %c0_i32_0 : i32, i32
  }
  func.func @transform_5(%arg0: i32) -> (i32, i32) {
    %c0_i32 = arith.constant 0 : i32
    %c0_i32_0 = arith.constant 0 : i32
    %c0_i32_1 = arith.constant 0 : i32
    return %c0_i32, %c0_i32_0 : i32, i32
  }
  func.func @transform_6(%arg0: i32) -> (i32, i32) {
    %c0_i32 = arith.constant 0 : i32
    %c0_i32_0 = arith.constant 0 : i32
    %c0_i32_1 = arith.constant 0 : i32
    return %c0_i32, %c0_i32_0 : i32, i32
  }
  func.func @transform_7(%arg0: i32) -> (i32, i32) {
    %c0_i32 = arith.constant 0 : i32
    %c0_i32_0 = arith.constant 0 : i32
    return %arg0, %c0_i32 : i32, i32
  }
  func.func @transform_8(%arg0: i32) -> (i32, i32) {
    %c0_i32 = arith.constant 0 : i32
    %c0_i32_0 = arith.constant 0 : i32
    %c0_i32_1 = arith.constant 0 : i32
    return %c0_i32, %c0_i32_0 : i32, i32
  }
  func.func @transform_9(%arg0: i32) -> (i32, i32) {
    %c0_i32 = arith.constant 0 : i32
    %c0_i32_0 = arith.constant 0 : i32
    %c0_i32_1 = arith.constant 0 : i32
    return %c0_i32, %c0_i32_0 : i32, i32
  }
  func.func @transform_10(%arg0: i32) -> (i32, i32) {
    %c0_i32 = arith.constant 0 : i32
    %c0_i32_0 = arith.constant 0 : i32
    return %arg0, %c0_i32 : i32, i32
  }
}

</mosaic_0001>

<llo_original>
// kernel: squashed_gaussian_actor.1
$region0: #{squashed_gaussian_actor.1}
  #allocation0 [shape = 'u32[]', space=smem, size = 0x4, offset = 0x4, fixed_abs, tag = 'smem constant byte address 0x4 - core index']
  #allocation1 [shape = 'u32[144,128]{1,0:T(1,128)}', space=vmem, size = 0x12000, scoped, tag = 'internal scratch']
  %s0 = inlined_call_operand.vmem [shape: f32[8,16], index: 0, kind: input, shape index: {}]
  %s1 = inlined_call_operand.vmem [shape: f32[16,32], index: 1, kind: input, shape index: {}]
  %s2 = inlined_call_operand.vmem [shape: f32[1,32], index: 2, kind: input, shape index: {}]
  %s3 = inlined_call_operand.vmem [shape: f32[32,32], index: 3, kind: input, shape index: {}]
  %s4 = inlined_call_operand.vmem [shape: f32[1,32], index: 4, kind: input, shape index: {}]
  %s5 = inlined_call_operand.vmem [shape: f32[32,16], index: 5, kind: input, shape index: {}]
  %s6 = inlined_call_operand.vmem [shape: f32[1,16], index: 6, kind: input, shape index: {}]
  %s7 = inlined_call_operand.hbm [shape: f32[8,8], index: 7, kind: input, shape index: {}]
  %s8 = inlined_call_operand.vmem [shape: f32[1,8], index: 8, kind: input, shape index: {}]
  %s9 = inlined_call_operand.vmem [shape: f32[1,8], index: 9, kind: input, shape index: {}]
  %s10 = inlined_call_operand.vmem [shape: f32[8,25], index: 10, kind: output, shape index: {}]
  %s11 = sld [smem:[#allocation0]]
  $region54: #{squashed_gaussian_actor.1} parent=0
    _
  %s13 = ssub.s32 1, %s11
  %s14 = scalar_select 0, %s13, %s11
  $region1: #{squashed_gaussian_actor.1} parent=0
    #allocation2 [shape = 'u8[4096]{0}', space=vmem, size = 0x1000, scoped, tag = 'input window, operand 7, single buffered']
    #allocation3 [shape = 's32[1]{0}', space=sflag, size = 0x4, scoped, tag = 'scoped memory for squashed_gaussian_actor.1']
    %15 = vsyncpa [#allocation3], 0
    // Predicated region
    $region2: #{squashed_gaussian_actor.1} parent=1 // pred_check
      _
    $region3: #{squashed_gaussian_actor.1} parent=1 // pred_check_branch
      %17 = sbr.rel (0) target = $region5
    $region4: #{squashed_gaussian_actor.1} parent=1 // pred_region
      _
    $region5: #{squashed_gaussian_actor.1} parent=1 // pred_fallthru
      _
    // Predicated region
    $region6: #{squashed_gaussian_actor.1} parent=1 // pred_check
      _
    $region7: #{squashed_gaussian_actor.1} parent=1 // pred_check_branch
      %19 = sbr.rel (0) target = $region9
    $region8: #{squashed_gaussian_actor.1} parent=1 // pred_region
      _
    $region9: #{squashed_gaussian_actor.1} parent=1 // pred_fallthru
      _
    // Predicated region
    $region10: #{squashed_gaussian_actor.1} parent=1 // pred_check
      _
    $region11: #{squashed_gaussian_actor.1} parent=1 // pred_check_branch
      %21 = sbr.rel (0) target = $region13
    $region12: #{squashed_gaussian_actor.1} parent=1 // pred_region
      _
    $region13: #{squashed_gaussian_actor.1} parent=1 // pred_fallthru
      _
    // Predicated region
    $region14: #{squashed_gaussian_actor.1} parent=1 // pred_check
      _
    $region15: #{squashed_gaussian_actor.1} parent=1 // pred_check_branch
      %23 = sbr.rel (0) target = $region17
    $region16: #{squashed_gaussian_actor.1} parent=1 // pred_region
      _
    $region17: #{squashed_gaussian_actor.1} parent=1 // pred_fallthru
      _
    // Predicated region
    $region18: #{squashed_gaussian_actor.1} parent=1 // pred_check
      _
    $region19: #{squashed_gaussian_actor.1} parent=1 // pred_check_branch
      %25 = sbr.rel (0) target = $region21
    $region20: #{squashed_gaussian_actor.1} parent=1 // pred_region
      _
    $region21: #{squashed_gaussian_actor.1} parent=1 // pred_fallthru
      _
    // Predicated region
    $region22: #{squashed_gaussian_actor.1} parent=1 // pred_check
      _
    $region23: #{squashed_gaussian_actor.1} parent=1 // pred_check_branch
      %27 = sbr.rel (0) target = $region25
    $region24: #{squashed_gaussian_actor.1} parent=1 // pred_region
      _
    $region25: #{squashed_gaussian_actor.1} parent=1 // pred_fallthru
      _
    // Predicated region
    $region26: #{squashed_gaussian_actor.1} parent=1 // pred_check
      _
    $region27: #{squashed_gaussian_actor.1} parent=1 // pred_check_branch
      %29 = sbr.rel (0) target = $region29
    $region28: #{squashed_gaussian_actor.1} parent=1 // pred_region
      _
    $region29: #{squashed_gaussian_actor.1} parent=1 // pred_fallthru
      _
    // Predicated region
    $region30: #{squashed_gaussian_actor.1} parent=1 // pred_check
      _
    $region31: #{squashed_gaussian_actor.1} parent=1 // pred_check_branch
      %31 = sbr.rel (0) target = $region33
    $region32: #{squashed_gaussian_actor.1} parent=1 // pred_region
      %s33 = ssub.s32 128, 128
      %34 = vsyncadd [#allocation3], %s33
      %s36 = sshll.u32 [#allocation2], 4
      %s37 = int_to_ptr.vmem [resolvable:$true] %s36
      %39 = dma.hbm_to_vmem [thread:$0]  %s7, 128, %s37, [#allocation3]
    $region33: #{squashed_gaussian_actor.1} parent=1 // pred_fallthru
      _
    // Predicated region
    $region34: #{squashed_gaussian_actor.1} parent=1 // pred_check
      _
    $region35: #{squashed_gaussian_actor.1} parent=1 // pred_check_branch
      %41 = sbr.rel (0) target = $region37
    $region36: #{squashed_gaussian_actor.1} parent=1 // pred_region
      _
    $region37: #{squashed_gaussian_actor.1} parent=1 // pred_fallthru
      _
    // Predicated region
    $region38: #{squashed_gaussian_actor.1} parent=1 // pred_check
      _
    $region39: #{squashed_gaussian_actor.1} parent=1 // pred_check_branch
      %43 = sbr.rel (0) target = $region41
    $region40: #{squashed_gaussian_actor.1} parent=1 // pred_region
      _
    $region41: #{squashed_gaussian_actor.1} parent=1 // pred_fallthru
      _
    // Predicated region
    $region42: #{squashed_gaussian_actor.1} parent=1 // pred_check
      _
    $region43: #{squashed_gaussian_actor.1} parent=1 // pred_check_branch
      %45 = sbr.rel (0) target = $region45
    $region44: #{squashed_gaussian_actor.1} parent=1 // pred_region
      %46 = dma.done [#allocation3], 128
    $region45: #{squashed_gaussian_actor.1} parent=1 // pred_fallthru
      _
    %v47 = vld [vmem:[%s0] sm:$0xff]
    %v48 = vld [vmem:[%s1] sm:$0xff]
    %v49 = vld [vmem:[%s1 + $0x8] sm:$0xff]
    %v50 = vld [vmem:[%s2] sm:$0x1]
    %v52 = vlaneseq
    %v53 = vshrl.u32 %v52, 7
    %v54 = vsub.s32 0, %v53
    %v55 = vrot.slane %v50, %v54
    %vm57 = vcmask 130048
    %v59 = vsel %vm57, %v47, 0
    %61 = vmatprep.subr.mxu0 0.0
    %62 = vmatpush1.msra.mxu0 %v48
    %63 = vmatprep.subr.mxu0 0.0
    %64 = vmatpush1.msra.mxu0 %v49
    %65 = vmatprep.subr.mxu0 0.0
    %66 = vmatpush1.msra.mxu0 0.0
    %67 = vmatprep.subr.mxu0 0.0
    %68 = vmatpush1.msra.mxu0 0.0
    %69 = vmatprep.subr.mxu0 0.0
    %70 = vmatpush1.msra.mxu0 0.0
    %71 = vmatprep.subr.mxu0 0.0
    %72 = vmatpush1.msra.mxu0 0.0
    %73 = vmatprep.subr.mxu0 0.0
    %74 = vmatpush1.msra.mxu0 0.0
    %75 = vmatprep.subr.mxu0 0.0
    %76 = vmatpush1.msra.mxu0 0.0
    %77 = vmatprep.subr.mxu0 0.0
    %78 = vmatpush1.msra.mxu0 0.0
    %79 = vmatprep.subr.mxu0 0.0
    %80 = vmatpush1.msra.mxu0 0.0
    %81 = vmatprep.subr.mxu0 0.0
    %82 = vmatpush1.msra.mxu0 0.0
    %83 = vmatprep.subr.mxu0 0.0
    %84 = vmatpush1.msra.mxu0 0.0
    %85 = vmatprep.subr.mxu0 0.0
    %86 = vmatpush1.msra.mxu0 0.0
    %87 = vmatprep.subr.mxu0 0.0
    %88 = vmatpush1.msra.mxu0 0.0
    %89 = vmatprep.subr.mxu0 0.0
    %90 = vmatpush1.msra.mxu0 0.0
    %91 = vmatprep.subr.mxu0 0.0
    %92 = vmatpush1.msra.mxu0 0.0
    %93 = vmatprep.subr.mxu0 0.0
    %94 = vmatpush1.msra.mxu0 0.0
    %95 = vmatprep.subr.mxu0 0.0
    %96 = vmatpush1.msra.mxu0 0.0
    %97 = vmatprep.subr.mxu0 0.0
    %98 = vmatpush1.msra.mxu0 0.0
    %99 = vmatprep.subr.mxu0 0.0
    %100 = vmatpush1.msra.mxu0 0.0
    %101 = vmatprep.subr.mxu0 0.0
    %102 = vmatpush1.msra.mxu0 0.0
    %103 = vmatprep.subr.mxu0 0.0
    %104 = vmatpush1.msra.mxu0 0.0
    %105 = vmatprep.subr.mxu0 0.0
    %106 = vmatpush1.msra.mxu0 0.0
    %107 = vmatprep.subr.mxu0 0.0
    %108 = vmatpush1.msra.mxu0 0.0
    %109 = vmatprep.subr.mxu0 0.0
    %110 = vmatpush1.msra.mxu0 0.0
    %111 = vmatprep.subr.mxu0 0.0
    %112 = vmatpush1.msra.mxu0 0.0
    %113 = vmatprep.subr.mxu0 0.0
    %114 = vmatpush1.msra.mxu0 0.0
    %115 = vmatprep.subr.mxu0 0.0
    %116 = vmatpush1.msra.mxu0 0.0
    %117 = vmatprep.subr.mxu0 0.0
    %118 = vmatpush1.msra.mxu0 0.0
    %119 = vmatprep.subr.mxu0 0.0
    %120 = vmatpush1.msra.mxu0 0.0
    %121 = vmatprep.subr.mxu0 0.0
    %122 = vmatpush1.msra.mxu0 0.0
    %123 = vmatprep.subr.mxu0 0.0
    %124 = vmatpush1.msra.mxu0 0.0
    %125 = vmatprep.mubr.f32.mxu0 0.0
    %126 = vmatmul.mubr.f32.gmra.mrb[0].mxu0 %v59
    %v127 = vpop.f32.mrb[0].mxu0
    %v128 = vadd.f32 %v55, %v127
    %v129 = vpop.f32.mrb[0].mxu0
    %130 = vdwg.mxu0
    %v131 = vmax.f32 %v128, 0.0
    %v132 = vld [vmem:[%s3] sm:$0xff]
    %v133 = vld [vmem:[%s3 + $0x8] sm:$0xff]
    %v134 = vld [vmem:[%s3 + $0x10] sm:$0xff]
    %v135 = vld [vmem:[%s3 + $0x18] sm:$0xff]
    %v136 = vld [vmem:[%s4] sm:$0x1]
    %v138 = vlaneseq
    %v139 = vshrl.u32 %v138, 7
    %v140 = vsub.s32 0, %v139
    %v141 = vrot.slane %v136, %v140
    %vm143 = vcmask 261120
    %v145 = vsel %vm143, %v131, 0
    %147 = vmatprep.subr.mxu0 0.0
    %148 = vmatpush1.msra.mxu0 %v132
    %149 = vmatprep.subr.mxu0 0.0
    %150 = vmatpush1.msra.mxu0 %v133
    %151 = vmatprep.subr.mxu0 0.0
    %152 = vmatpush1.msra.mxu0 %v134
    %153 = vmatprep.subr.mxu0 0.0
    %154 = vmatpush1.msra.mxu0 %v135
    %155 = vmatprep.subr.mxu0 0.0
    %156 = vmatpush1.msra.mxu0 0.0
    %157 = vmatprep.subr.mxu0 0.0
    %158 = vmatpush1.msra.mxu0 0.0
    %159 = vmatprep.subr.mxu0 0.0
    %160 = vmatpush1.msra.mxu0 0.0
    %161 = vmatprep.subr.mxu0 0.0
    %162 = vmatpush1.msra.mxu0 0.0
    %163 = vmatprep.subr.mxu0 0.0
    %164 = vmatpush1.msra.mxu0 0.0
    %165 = vmatprep.subr.mxu0 0.0
    %166 = vmatpush1.msra.mxu0 0.0
    %167 = vmatprep.subr.mxu0 0.0
    %168 = vmatpush1.msra.mxu0 0.0
    %169 = vmatprep.subr.mxu0 0.0
    %170 = vmatpush1.msra.mxu0 0.0
    %171 = vmatprep.subr.mxu0 0.0
    %172 = vmatpush1.msra.mxu0 0.0
    %173 = vmatprep.subr.mxu0 0.0
    %174 = vmatpush1.msra.mxu0 0.0
    %175 = vmatprep.subr.mxu0 0.0
    %176 = vmatpush1.msra.mxu0 0.0
    %177 = vmatprep.subr.mxu0 0.0
    %178 = vmatpush1.msra.mxu0 0.0
    %179 = vmatprep.subr.mxu0 0.0
    %180 = vmatpush1.msra.mxu0 0.0
    %181 = vmatprep.subr.mxu0 0.0
    %182 = vmatpush1.msra.mxu0 0.0
    %183 = vmatprep.subr.mxu0 0.0
    %184 = vmatpush1.msra.mxu0 0.0
    %185 = vmatprep.subr.mxu0 0.0
    %186 = vmatpush1.msra.mxu0 0.0
    %187 = vmatprep.subr.mxu0 0.0
    %188 = vmatpush1.msra.mxu0 0.0
    %189 = vmatprep.subr.mxu0 0.0
    %190 = vmatpush1.msra.mxu0 0.0
    %191 = vmatprep.subr.mxu0 0.0
    %192 = vmatpush1.msra.mxu0 0.0
    %193 = vmatprep.subr.mxu0 0.0
    %194 = vmatpush1.msra.mxu0 0.0
    %195 = vmatprep.subr.mxu0 0.0
    %196 = vmatpush1.msra.mxu0 0.0
    %197 = vmatprep.subr.mxu0 0.0
    %198 = vmatpush1.msra.mxu0 0.0
    %199 = vmatprep.subr.mxu0 0.0
    %200 = vmatpush1.msra.mxu0 0.0
    %201 = vmatprep.subr.mxu0 0.0
    %202 = vmatpush1.msra.mxu0 0.0
    %203 = vmatprep.subr.mxu0 0.0
    %204 = vmatpush1.msra.mxu0 0.0
    %205 = vmatprep.subr.mxu0 0.0
    %206 = vmatpush1.msra.mxu0 0.0
    %207 = vmatprep.subr.mxu0 0.0
    %208 = vmatpush1.msra.mxu0 0.0
    %209 = vmatprep.subr.mxu0 0.0
    %210 = vmatpush1.msra.mxu0 0.0
    %211 = vmatprep.mubr.f32.mxu0 0.0
    %212 = vmatmul.mubr.f32.gmra.mrb[0].mxu0 %v145
    %v213 = vpop.f32.mrb[0].mxu0
    %v214 = vadd.f32 %v141, %v213
    %v215 = vpop.f32.mrb[0].mxu0
    %216 = vdwg.mxu0
    %v217 = vmax.f32 %v214, 0.0
    %v218 = vld [vmem:[%s5] sm:$0xff]
    %v219 = vld [vmem:[%s5 + $0x8] sm:$0xff]
    %v220 = vld [vmem:[%s5 + $0x10] sm:$0xff]
    %v221 = vld [vmem:[%s5 + $0x18] sm:$0xff]
    %v222 = vld [vmem:[%s6] sm:$0x1]
    %v224 = vlaneseq
    %v225 = vshrl.u32 %v224, 7
    %v226 = vsub.s32 0, %v225
    %v227 = vrot.slane %v222, %v226
    %v230 = vsel %vm143, %v217, 0
    %232 = vmatprep.subr.mxu0 0.0
    %233 = vmatpush1.msra.mxu0 %v218
    %234 = vmatprep.subr.mxu0 0.0
    %235 = vmatpush1.msra.mxu0 %v219
    %236 = vmatprep.subr.mxu0 0.0
    %237 = vmatpush1.msra.mxu0 %v220
    %238 = vmatprep.subr.mxu0 0.0
    %239 = vmatpush1.msra.mxu0 %v221
    %240 = vmatprep.subr.mxu0 0.0
    %241 = vmatpush1.msra.mxu0 0.0
    %242 = vmatprep.subr.mxu0 0.0
    %243 = vmatpush1.msra.mxu0 0.0
    %244 = vmatprep.subr.mxu0 0.0
    %245 = vmatpush1.msra.mxu0 0.0
    %246 = vmatprep.subr.mxu0 0.0
    %247 = vmatpush1.msra.mxu0 0.0
    %248 = vmatprep.subr.mxu0 0.0
    %249 = vmatpush1.msra.mxu0 0.0
    %250 = vmatprep.subr.mxu0 0.0
    %251 = vmatpush1.msra.mxu0 0.0
    %252 = vmatprep.subr.mxu0 0.0
    %253 = vmatpush1.msra.mxu0 0.0
    %254 = vmatprep.subr.mxu0 0.0
    %255 = vmatpush1.msra.mxu0 0.0
    %256 = vmatprep.subr.mxu0 0.0
    %257 = vmatpush1.msra.mxu0 0.0
    %258 = vmatprep.subr.mxu0 0.0
    %259 = vmatpush1.msra.mxu0 0.0
    %260 = vmatprep.subr.mxu0 0.0
    %261 = vmatpush1.msra.mxu0 0.0
    %262 = vmatprep.subr.mxu0 0.0
    %263 = vmatpush1.msra.mxu0 0.0
    %264 = vmatprep.subr.mxu0 0.0
    %265 = vmatpush1.msra.mxu0 0.0
    %266 = vmatprep.subr.mxu0 0.0
    %267 = vmatpush1.msra.mxu0 0.0
    %268 = vmatprep.subr.mxu0 0.0
    %269 = vmatpush1.msra.mxu0 0.0
    %270 = vmatprep.subr.mxu0 0.0
    %271 = vmatpush1.msra.mxu0 0.0
    %272 = vmatprep.subr.mxu0 0.0
    %273 = vmatpush1.msra.mxu0 0.0
    %274 = vmatprep.subr.mxu0 0.0
    %275 = vmatpush1.msra.mxu0 0.0
    %276 = vmatprep.subr.mxu0 0.0
    %277 = vmatpush1.msra.mxu0 0.0
    %278 = vmatprep.subr.mxu0 0.0
    %279 = vmatpush1.msra.mxu0 0.0
    %280 = vmatprep.subr.mxu0 0.0
    %281 = vmatpush1.msra.mxu0 0.0
    %282 = vmatprep.subr.mxu0 0.0
    %283 = vmatpush1.msra.mxu0 0.0
    %284 = vmatprep.subr.mxu0 0.0
    %285 = vmatpush1.msra.mxu0 0.0
    %286 = vmatprep.subr.mxu0 0.0
    %287 = vmatpush1.msra.mxu0 0.0
    %288 = vmatprep.subr.mxu0 0.0
    %289 = vmatpush1.msra.mxu0 0.0
    %290 = vmatprep.subr.mxu0 0.0
    %291 = vmatpush1.msra.mxu0 0.0
    %292 = vmatprep.subr.mxu0 0.0
    %293 = vmatpush1.msra.mxu0 0.0
    %294 = vmatprep.subr.mxu0 0.0
    %295 = vmatpush1.msra.mxu0 0.0
    %296 = vmatprep.mubr.f32.mxu0 0.0
    %297 = vmatmul.mubr.f32.gmra.mrb[0].mxu0 %v230
    %v298 = vpop.f32.mrb[0].mxu0
    %v299 = vadd.f32 %v227, %v298
    %v300 = vpop.f32.mrb[0].mxu0
    %301 = vdwg.mxu0
    %v302 = vmax.f32 %v299, -20.0
    %v303 = vmin.f32 %v302, 2.0
    %v304 = vmul.f32 %v303, 1.442695
    %v305 = vpow.pop %v304
    %v306 = vld [vmem:[#allocation2] sm:$0xff]
    %308 = vrot.lane.b32.xlu0 %v306, 8
    %v309 = vpop.permute.xlu0 %308
    %v311 = vmul.f32 %v305, %v309
    %313 = vrot.lane.b32.xlu0 %v311, 120
    %v314 = vpop.permute.xlu0 %313
    %v316 = vadd.f32 %v299, %v314
    %v317 = vsub.f32 0.6931472, %v316
    %v318 = vmul.f32 %v316, -2.0
    %v319 = vmax.f32 %v318, 0.0
    %v320 = vand.u32 2147483647, %v318
    %v321 = vsub.f32 0.0, %v320
    %v322 = vmul.f32 %v321, 1.442695
    %v323 = vpow.pop %v322
    %v324 = vadd.f32 %v323, 1.0
    %v325 = vlog2.pop %v324
    %v326 = vmul.f32 %v325, 0.6931472
    %v327 = vmul.f32 -0.5, %v323
    %v328 = vadd.f32 %v327, 1.0
    %v329 = vmul.f32 %v328, %v323
    %v330 = vand.u32 2147483647, %v323
    %vm331 = vcmp.lt.f32.partialorder %v330, 0.0004427343
    %v332 = vsel %vm331, %v329, %v326
    %v333 = vadd.f32 %v319, %v332
    %v334 = vsub.f32 %v317, %v333
    %v335 = vmul.f32 %v334, 2.0
    %v336 = vmul.f32 %v306, %v306
    %v337 = vmul.f32 %v336, -0.5
    %339 = vrot.lane.b32.xlu0 %v303, 120
    %v340 = vpop.permute.xlu0 %339
    %v342 = vsub.f32 %v337, %v340
    %v343 = vsub.f32 %v342, 0.9189385
    %v344 = vsub.f32 %v343, %v335
    %vm345 = vcmask 64512
    %v346 = vsel %vm345, %v344, 0.0
    %347 = vadd.xlane.f32.xlu0 %v346
    %v348 = vpop.xlane.xlu0 %347
    %v349 = vld [vmem:[%s9] sm:$0x1]
    %v350 = vtanh.pop %v316
    %v352 = vlaneseq
    %v353 = vshrl.u32 %v352, 7
    %v354 = vsub.s32 0, %v353
    %v355 = vrot.slane %v349, %v354
    %v357 = vmul.f32 %v355, %v350
    %v358 = vld [vmem:[%s8] sm:$0x1]
    %v360 = vlaneseq
    %v361 = vshrl.u32 %v360, 7
    %v362 = vsub.s32 0, %v361
    %v363 = vrot.slane %v358, %v362
    %v365 = vadd.f32 %v357, %v363
    %366 = vst.msk [vmem:[%s10] sm:$0xff] %vm345, %v365
    %368 = vrot.lane.b32.xlu0 %v299, 8
    %v369 = vpop.permute.xlu0 %368
    %vm371 = vcmask 130112
    %372 = vst.msk [vmem:[%s10] sm:$0xff] %vm371, %v369
    %374 = vrot.lane.b32.xlu0 %v305, 8
    %v375 = vpop.permute.xlu0 %374
    %vm377 = vcmask 195712
    %378 = vst.msk [vmem:[%s10] sm:$0xff] %vm377, %v375
    %vm379 = vcmask 203968
    %380 = vst.msk [vmem:[%s10] sm:$0xff] %vm379, %v348
    // Predicated region
    $region46: #{squashed_gaussian_actor.1} parent=1 // pred_check
      _
    $region47: #{squashed_gaussian_actor.1} parent=1 // pred_check_branch
      %382 = sbr.rel (0) target = $region49
    $region48: #{squashed_gaussian_actor.1} parent=1 // pred_region
      _
    $region49: #{squashed_gaussian_actor.1} parent=1 // pred_fallthru
      _
    // Predicated region
    $region50: #{squashed_gaussian_actor.1} parent=1 // pred_check
      _
    $region51: #{squashed_gaussian_actor.1} parent=1 // pred_check_branch
      %384 = sbr.rel (0) target = $region53
    $region52: #{squashed_gaussian_actor.1} parent=1 // pred_region
      _
    $region53: #{squashed_gaussian_actor.1} parent=1 // pred_fallthru
      _
    %385 = vsyncpa [#allocation3], 1

</llo_original>
